<compile_context>
chip_gen: v5e
topology: v5e:2x2
jax: 0.10.0
libtpu: 0.0.40
codegen_flags: <defaults>
</compile_context>

<pallas_src>
import functools

import jax
import jax.numpy as jnp
from jax.experimental import pallas as pl
from jax.experimental.pallas import tpu as pltpu

_OUT_SUBLANES = 8
_OUT_LANES = 128


def _cdiv(a, b):
    return -(-a // b)


def _round_up(v, m):
    return ((v + m - 1) // m) * m


def _vmem_capacity_bytes():
    """Physical VMEM of the local chip; conservative fallback if unavailable."""
    try:
        info = pltpu.get_tpu_info()
        cap = int(getattr(info, "vmem_capacity_bytes", 0))
        if cap > 0:
            return cap
    except Exception:
        pass
    return 64 << 20  # v7x per-TensorCore VMEM (most restrictive generation)


def _pick_row_tile(B, tb_cap, max_block_rows):
    """Choose a row tile: big (to amortize per-step overhead) but split into
    >= 2 tiles whenever B allows so v7x's second TensorCore has work, with a
    mild preference for an even number of tiles."""
    tb = min(tb_cap, max_block_rows, _round_up(B, 8))
    if B > 8:
        tb = min(tb, _round_up(_cdiv(B, 2), 8))
    tb = max(8, (tb // 8) * 8)
    nt = _cdiv(B, tb)
    if nt > 1 and nt % 2 == 1:
        cand = max(8, _round_up(_cdiv(B, nt + 1), 8))
        if _cdiv(B, cand) % 2 == 0:
            tb, nt = cand, _cdiv(B, cand)
    return tb, nt


def _finalize_partial(xx, yy, xy, alpha, tile_idx, tile_rows, total_rows):
    """Per-row cosine -> (1 - cos)**alpha -> masked tile partial sum."""
    # Matches F.normalize's x / max(||x||, eps) semantics exactly since
    # max(sqrt(s), eps) == sqrt(max(s, eps**2)).
    eps_sq = jnp.float32(1e-24)  # (1e-12)**2, F.normalize default eps squared
    inv_norms = jax.lax.rsqrt(jnp.maximum(xx, eps_sq)) * jax.lax.rsqrt(
        jnp.maximum(yy, eps_sq)
    )
    d = jnp.float32(1.0) - xy * inv_norms  # [TB, 1]

    a = float(alpha)
    if a == int(a) and 1 <= int(a) <= 8:
        # Small integer alpha -> cheap repeated multiply on the VPU.
        loss = d
        for _ in range(int(a) - 1):
            loss = loss * d
    else:
        loss = jnp.power(d, jnp.float32(a))

    # Mask out-of-bounds rows of a partial last block (statically elided when
    # the tile divides B evenly).  jnp.where discards any NaN/Inf the garbage
    # rows may have produced.
    if total_rows % tile_rows != 0:
        row_ids = tile_idx * tile_rows + jax.lax.broadcasted_iota(
            jnp.int32, (tile_rows, 1), 0
        )
        loss = jnp.where(row_ids < total_rows, loss, jnp.float32(0.0))
    return jnp.sum(loss)


def _sce_kernel(x_ref, y_ref, out_ref, *, alpha, tile_rows, total_rows):
    """Whole-D-in-one-block variant: fused 3-reduction cosine per row tile."""
    i = pl.program_id(0)

    x = x_ref[...].astype(jnp.float32)  # [TB, D] (no-op cast for f32 inputs)
    y = y_ref[...].astype(jnp.float32)

    xx = jnp.sum(x * x, axis=-1, keepdims=True)  # [TB, 1]
    yy = jnp.sum(y * y, axis=-1, keepdims=True)
    xy = jnp.sum(x * y, axis=-1, keepdims=True)

    partial = _finalize_partial(xx, yy, xy, alpha, i, tile_rows, total_rows)
    # One lane-dense (8, 128) block per row tile holding this tile's partial
    # sum (broadcast); the wrapper reads element [i, 0, 0] and finishes the
    # mean in plain JAX. Keeps the row grid axis fully parallel.
    out_ref[...] = jnp.full((1, _OUT_SUBLANES, _OUT_LANES), partial, jnp.float32)


def _sce_kernel_dtiled(
    x_ref, y_ref, out_ref, xx_ref, yy_ref, xy_ref, *,
    alpha, tile_rows, total_rows, tile_d, total_d,
):
    """D-tiled variant: grid=(row_tiles, d_tiles); xx/yy/xy accumulate in VMEM
    scratch across the (arbitrary) D axis, finalize on the last D step."""
    i = pl.program_id(0)
    j = pl.program_id(1)

    @pl.when(j == 0)
    def _():
        xx_ref[...] = jnp.zeros_like(xx_ref)
        yy_ref[...] = jnp.zeros_like(yy_ref)
        xy_ref[...] = jnp.zeros_like(xy_ref)

    x = x_ref[...].astype(jnp.float32)  # [TB, TD]
    y = y_ref[...].astype(jnp.float32)

    # Statically-gated column mask for a partial last D block.
    if total_d % tile_d != 0:
        col_ids = j * tile_d + jax.lax.broadcasted_iota(jnp.int32, (1, tile_d), 1)
        col_mask = col_ids < total_d
        x = jnp.where(col_mask, x, jnp.float32(0.0))
        y = jnp.where(col_mask, y, jnp.float32(0.0))

    xx_ref[...] += jnp.sum(x * x, axis=-1, keepdims=True)
    yy_ref[...] += jnp.sum(y * y, axis=-1, keepdims=True)
    xy_ref[...] += jnp.sum(x * y, axis=-1, keepdims=True)

    @pl.when(j == pl.num_programs(1) - 1)
    def _():
        partial = _finalize_partial(
            xx_ref[...], yy_ref[...], xy_ref[...], alpha, i, tile_rows, total_rows
        )
        out_ref[...] = jnp.full(
            (1, _OUT_SUBLANES, _OUT_LANES), partial, jnp.float32
        )


def sce_loss(x, y, alpha: float = 3.0, *, max_block_rows: int = 32768,
             max_block_cols: int | None = None):
    """Pallas-TPU implementation of SCELoss.forward(x, y)."""
    assert x.shape == y.shape, "x and y must have identical shapes"
    D = x.shape[-1]
    B = 1
    for s in x.shape[:-1]:
        B *= s
    x2 = x.reshape(B, D)
    y2 = y.reshape(B, D)

    itemsize = jnp.dtype(x2.dtype).itemsize
    # Budget as if elements were f32 so in-kernel f32 working copies of narrow
    # (bf16/fp8) inputs are covered by the same formula.
    eff_itemsize = max(itemsize, 4)

    vmem_cap = _vmem_capacity_bytes()
    # Pipelined-input footprint budget = 2 inputs * 2 buffers * TB * D(tile) *
    # eff_itemsize: ~48 MiB on 128 MiB parts (v5e/v6e), ~24 MiB on v7x.
    input_budget = min(int(0.375 * vmem_cap), 48 << 20)
    vmem_limit_cap = int(0.75 * vmem_cap)
    out_bytes = 2 * _OUT_SUBLANES * _OUT_LANES * 4
    headroom = 4 << 20

    whole_d_row_bytes = 4 * D * eff_itemsize
    d_fits = 8 * whole_d_row_bytes <= input_budget
    use_d_tiling = (not d_fits) or (max_block_cols is not None and max_block_cols < D)

    if not use_d_tiling:
        # ---- whole-D path: 1-D grid over row tiles ----------------------
        tb_cap = max(8, input_budget // whole_d_row_bytes)
        TB, num_tiles = _pick_row_tile(B, tb_cap, max_block_rows)

        vmem_limit = 4 * TB * D * itemsize + 2 * TB * D * 4 + out_bytes + headroom
        vmem_limit = int(min(max(vmem_limit, 32 << 20), vmem_limit_cap))

        kernel = functools.partial(
            _sce_kernel, alpha=float(alpha), tile_rows=TB, total_rows=B
        )
        partials = pl.pallas_call(
            kernel,
            out_shape=jax.ShapeDtypeStruct(
                (num_tiles, _OUT_SUBLANES, _OUT_LANES), jnp.float32
            ),
            grid_spec=pltpu.PrefetchScalarGridSpec(
                num_scalar_prefetch=0,
                grid=(num_tiles,),
                in_specs=[
                    pl.BlockSpec((TB, D), lambda i: (i, 0)),
                    pl.BlockSpec((TB, D), lambda i: (i, 0)),
                ],
                out_specs=pl.BlockSpec(
                    (1, _OUT_SUBLANES, _OUT_LANES), lambda i: (i, 0, 0)
                ),
            ),
            compiler_params=pltpu.CompilerParams(
                dimension_semantics=("parallel",),
                vmem_limit_bytes=vmem_limit,
            ),
        )(x2, y2)
    else:
        # ---- D-tiled path: 2-D grid (row tiles parallel, D tiles arbitrary)
        td_cap = max(128, (input_budget // (8 * 4 * eff_itemsize)) // 128 * 128)
        TD = min(_round_up(D, 128), td_cap, 2048)
        if max_block_cols is not None:
            TD = min(TD, max(128, (max_block_cols // 128) * 128))
        num_d_tiles = _cdiv(D, TD)

        # +3 * 512 B/row for the three lane-padded (TB, 1) f32 accumulators.
        per_row_bytes = 4 * TD * eff_itemsize + 3 * 128 * 4
        tb_cap = max(8, input_budget // per_row_bytes)
        TB, num_row_tiles = _pick_row_tile(B, tb_cap, max_block_rows)

        vmem_limit = (
            4 * TB * TD * itemsize + 2 * TB * TD * 4 + 3 * TB * 128 * 4
            + out_bytes + headroom
        )
        vmem_limit = int(min(max(vmem_limit, 32 << 20), vmem_limit_cap))

        kernel = functools.partial(
            _sce_kernel_dtiled, alpha=float(alpha), tile_rows=TB, total_rows=B,
            tile_d=TD, total_d=D,
        )
        partials = pl.pallas_call(
            kernel,
            out_shape=jax.ShapeDtypeStruct(
                (num_row_tiles, _OUT_SUBLANES, _OUT_LANES), jnp.float32
            ),
            grid_spec=pltpu.PrefetchScalarGridSpec(
                num_scalar_prefetch=0,
                grid=(num_row_tiles, num_d_tiles),
                in_specs=[
                    pl.BlockSpec((TB, TD), lambda i, j: (i, j)),
                    pl.BlockSpec((TB, TD), lambda i, j: (i, j)),
                ],
                out_specs=pl.BlockSpec(
                    (1, _OUT_SUBLANES, _OUT_LANES), lambda i, j: (i, 0, 0)
                ),
                scratch_shapes=[
                    pltpu.VMEM((TB, 1), jnp.float32),
                    pltpu.VMEM((TB, 1), jnp.float32),
                    pltpu.VMEM((TB, 1), jnp.float32),
                ],
            ),
            compiler_params=pltpu.CompilerParams(
                dimension_semantics=("parallel", "arbitrary"),
                vmem_limit_bytes=vmem_limit,
            ),
        )(x2, y2)

    # Tiny final reduction over per-tile partial sums in plain JAX.
    return jnp.sum(partials[:, 0, 0]) / jnp.float32(B)


def _reference(x, y, alpha=3.0):
    eps = 1e-12
    xn = x / jnp.maximum(jnp.linalg.norm(x, axis=-1, keepdims=True), eps)
    yn = y / jnp.maximum(jnp.linalg.norm(y, axis=-1, keepdims=True), eps)
    return jnp.mean((1.0 - jnp.sum(xn * yn, axis=-1)) ** alpha)


if __name__ == "__main__":
    key = jax.random.PRNGKey(0)
    k1, k2, k3, k4, k5, k6 = jax.random.split(key, 6)

    # Case 1: aligned shapes; B=16 splits into 2 parallel row tiles (no mask).
    x1 = jax.random.normal(k1, (2, 8, 128), dtype=jnp.float32)
    y1 = jax.random.normal(k2, (2, 8, 128), dtype=jnp.float32)
    out1 = jax.block_until_ready(sce_loss(x1, y1, alpha=3.0))
    ref1 = _reference(x1, y1, alpha=3.0)
    assert jnp.allclose(out1, ref1, rtol=1e-4, atol=1e-4), (out1, ref1)

    # Case 2: ragged batch (B=39), multiple row tiles, NO padding — exercises
    # the partial-last-block row mask and per-tile partial-sum reduction.
    x2 = jax.random.normal(k3, (3, 13, 64), dtype=jnp.float32)
    y2 = jax.random.normal(k4, (3, 13, 64), dtype=jnp.float32)
    out2 = jax.block_until_ready(sce_loss(x2, y2, alpha=3.0, max_block_rows=16))
    ref2 = _reference(x2, y2, alpha=3.0)
    assert jnp.allclose(out2, ref2, rtol=1e-4, atol=1e-4), (out2, ref2)

    # Case 3: forced D-tiling path (reduction grid axis + scratch accumulators
    # + finalize-on-last-step), with a ragged row tile as well.
    x3 = jax.random.normal(k5, (4, 10, 256), dtype=jnp.float32)
    y3 = jax.random.normal(k6, (4, 10, 256), dtype=jnp.float32)
    out3 = jax.block_until_ready(
        sce_loss(x3, y3, alpha=3.0, max_block_rows=16, max_block_cols=128)
    )
    ref3 = _reference(x3, y3, alpha=3.0)
    assert jnp.allclose(out3, ref3, rtol=1e-4, atol=1e-4), (out3, ref3)

    print("KERNEL_OK")
</pallas_src>

<mosaic_0001>
module attributes {stable_mosaic.version = 11 : i64} {
  func.func @_sce_kernel(%arg0: i32, %arg1: memref<8x128xf32, #tpu.memory_space<vmem>>, %arg2: memref<8x128xf32, #tpu.memory_space<vmem>>, %arg3: memref<1x8x128xf32, #tpu.memory_space<vmem>>) attributes {dimension_semantics = [#tpu.dimension_semantics<parallel>], iteration_bounds = array<i64: 2>, scalar_prefetch = 0 : i64, scratch_operands = 0 : i64, tpu.core_type = #tpu.core_type<tc>, window_params = [{transform_indices = @transform_0, window_bounds = array<i64: 8, 128>}, {transform_indices = @transform_1, window_bounds = array<i64: 8, 128>}, {transform_indices = @transform_2, window_bounds = array<i64: 1, 8, 128>}]} {
    %c0 = arith.constant 0 : index
    %c0_0 = arith.constant 0 : index
    %0 = vector.load %arg1[%c0, %c0_0] : memref<8x128xf32, #tpu.memory_space<vmem>>, vector<8x128xf32>
    %c0_1 = arith.constant 0 : index
    %c0_2 = arith.constant 0 : index
    %1 = vector.load %arg2[%c0_1, %c0_2] : memref<8x128xf32, #tpu.memory_space<vmem>>, vector<8x128xf32>
    %2 = arith.mulf %0, %0 : vector<8x128xf32>
    %cst = arith.constant dense<0.000000e+00> : vector<8xf32>
    %3 = vector.multi_reduction <add>, %2, %cst [1] : vector<8x128xf32> to vector<8xf32>
    %4 = vector.shape_cast %3 : vector<8xf32> to vector<8x1xf32>
    %5 = arith.mulf %1, %1 : vector<8x128xf32>
    %cst_3 = arith.constant dense<0.000000e+00> : vector<8xf32>
    %6 = vector.multi_reduction <add>, %5, %cst_3 [1] : vector<8x128xf32> to vector<8xf32>
    %7 = vector.shape_cast %6 : vector<8xf32> to vector<8x1xf32>
    %8 = arith.mulf %0, %1 : vector<8x128xf32>
    %cst_4 = arith.constant dense<0.000000e+00> : vector<8xf32>
    %9 = vector.multi_reduction <add>, %8, %cst_4 [1] : vector<8x128xf32> to vector<8xf32>
    %10 = vector.shape_cast %9 : vector<8xf32> to vector<8x1xf32>
    %cst_5 = arith.constant 1.000000e-24 : f32
    %11 = vector.broadcast %cst_5 : f32 to vector<8x1xf32>
    %12 = arith.maximumf %4, %11 : vector<8x1xf32>
    %13 = math.rsqrt %12 : vector<8x1xf32>
    %cst_6 = arith.constant 1.000000e-24 : f32
    %14 = vector.broadcast %cst_6 : f32 to vector<8x1xf32>
    %15 = arith.maximumf %7, %14 : vector<8x1xf32>
    %16 = math.rsqrt %15 : vector<8x1xf32>
    %17 = arith.mulf %13, %16 : vector<8x1xf32>
    %18 = arith.mulf %10, %17 : vector<8x1xf32>
    %cst_7 = arith.constant 1.000000e+00 : f32
    %19 = vector.broadcast %cst_7 : f32 to vector<8x1xf32>
    %20 = arith.subf %19, %18 : vector<8x1xf32>
    %21 = arith.mulf %20, %20 : vector<8x1xf32>
    %22 = arith.mulf %21, %20 : vector<8x1xf32>
    %23 = vector.shape_cast %22 : vector<8x1xf32> to vector<1x8x1xf32>
    %cst_8 = arith.constant dense<0.000000e+00> : vector<1xf32>
    %24 = vector.multi_reduction <add>, %23, %cst_8 [1, 2] : vector<1x8x1xf32> to vector<1xf32>
    %25 = vector.shape_cast %24 : vector<1xf32> to vector<1x1x1xf32>
    %26 = vector.extract %25[0, 0, 0] : f32 from vector<1x1x1xf32>
    %27 = vector.broadcast %26 : f32 to vector<1x8x128xf32>
    %c0_9 = arith.constant 0 : index
    %c0_10 = arith.constant 0 : index
    %c0_11 = arith.constant 0 : index
    %28 = vector.load %arg3[%c0_9, %c0_10, %c0_11] : memref<1x8x128xf32, #tpu.memory_space<vmem>>, vector<1x8x128xf32>
    tpu.vector_store %arg3[%c0_9, %c0_10, %c0_11], %27 {strides = array<i32>} : memref<1x8x128xf32, #tpu.memory_space<vmem>>, vector<1x8x128xf32>,
    return
  }
  func.func @transform_0(%arg0: i32) -> (i32, i32) {
    %c0_i32 = arith.constant 0 : i32
    %c0_i32_0 = arith.constant 0 : i32
    return %arg0, %c0_i32 : i32, i32
  }
  func.func @transform_1(%arg0: i32) -> (i32, i32) {
    %c0_i32 = arith.constant 0 : i32
    %c0_i32_0 = arith.constant 0 : i32
    return %arg0, %c0_i32 : i32, i32
  }
  func.func @transform_2(%arg0: i32) -> (i32, i32, i32) {
    %c0_i32 = arith.constant 0 : i32
    %c0_i32_0 = arith.constant 0 : i32
    %c0_i32_1 = arith.constant 0 : i32
    return %arg0, %c0_i32, %c0_i32_0 : i32, i32, i32
  }
}

</mosaic_0001>

<llo_original>
// kernel: tpu_custom_call.1
$region0: #{tpu_custom_call.1}
  #allocation0 [shape = 'u32[]', space=smem, size = 0x4, offset = 0x4, fixed_abs, tag = 'smem constant byte address 0x4 - core index']
  #allocation1 [shape = 'u32[72,128]{1,0:T(1,128)}', space=vmem, size = 0x9000, scoped, tag = 'internal scratch']
  %s0 = inlined_call_operand.hbm [shape: f32[16,128], index: 0, kind: input, shape index: {}]
  %s1 = inlined_call_operand.hbm [shape: f32[16,128], index: 1, kind: input, shape index: {}]
  %s2 = inlined_call_operand.hbm [shape: f32[2,8,128], index: 2, kind: output, shape index: {}]
  %s3 = sld [smem:[#allocation0]]
  $region49: #{tpu_custom_call.1} parent=0
    _
  %s5 = ssub.s32 1, %s3
  %s6 = scalar_select 0, %s5, %s3
  $region1: #{tpu_custom_call.1} parent=0
    #allocation2 [shape = 'u8[8192]{0}', space=vmem, size = 0x2000, scoped, tag = 'input window, operand 0']
    #allocation3 [shape = 's32[2]{0}', space=sflag, size = 0x8, scoped, tag = 'scoped memory for tpu_custom_call.1']
    #allocation4 [shape = 's32[2]{0}', space=sflag, size = 0x8, scoped, tag = 'scoped memory for tpu_custom_call.1']
    #allocation5 [shape = 'u8[8192]{0}', space=vmem, size = 0x2000, scoped, tag = 'input window, operand 1']
    #allocation6 [shape = 's32[2]{0}', space=sflag, size = 0x8, scoped, tag = 'scoped memory for tpu_custom_call.1']
    #allocation7 [shape = 'u8[8192]{0}', space=vmem, size = 0x2000, scoped, tag = 'output window, operand 0']
    %7 = vsyncpa [#allocation3], 0
    %s8 = scalar_lea.sflag [#allocation3], 1
    %9 = vsyncpa %s8, 0
    %10 = vsyncpa [#allocation6], 0
    %s11 = scalar_lea.sflag [#allocation6], 1
    %12 = vsyncpa %s11, 0
    %13 = vsyncpa [#allocation4], 0
    %s14 = scalar_lea.sflag [#allocation4], 1
    %15 = vsyncpa %s14, 0
    loop: start=0, step=1, limit=4
    $region2: #{tpu_custom_call.1} parent=1 // loop_pre_header
      _
    $region3: #{tpu_custom_call.1} parent=1 // loop_header
      %s17 = sphi 0, %s21
      %p18 = scmp.ge.s32.totalorder %s17, 4
      %s27 = sphi 0, %s29
      %s30 = sphi 0, %s27
      %s31 = sphi 0, %s30
      %s47 = sphi 0, %s31
      %s53 = sphi 0, %s55
      %s56 = sphi 0, %s53
      %s57 = sphi 0, %s56
      %s73 = sphi 0, %s57
      %s79 = sphi 0, %s81
      %s82 = sphi 0, %s79
      %s83 = sphi 0, %s82
      %s99 = sphi 0, %s83
    $region4: #{tpu_custom_call.1} parent=1 // loop_header_branch
      %20 = sbr.rel (%p18) target = $region8
    $region5: #{tpu_custom_call.1} parent=1 // loop_body
      %s22 = ssub.s32 %s17, 1
      %s23 = ssub.s32 %s17, 2
      %s24 = sadd.s32 %s17, 1
      %s25 = ssub.s32 %s17, %s24
      %p26 = scmp.eq.s32.totalorder %s25, 0
      %s28 = sadd.s32 %s27, 1
      %s29 = scalar_select %p26, %s27, %s28
      %p32 = pneg %p26
      %p33 = scmp.eq.s32.totalorder %s17, 1
      %p34 = por %p32, %p33
      %p35 = scmp.ne.s32.totalorder %s27, %s30
      %p36 = scmp.eq.s32.totalorder %s17, 0
      %p37 = por %p35, %p36
      %p38 = scmp.ne.s32.totalorder %s27, %s30
      %p39 = scmp.eq.s32.totalorder %s22, 1
      %p40 = por %p38, %p39
      %p41 = scmp.ne.s32.totalorder %s30, %s31
      %p42 = scmp.eq.s32.totalorder %s22, 0
      %p43 = por %p41, %p42
      %p44 = scmp.ne.s32.totalorder %s30, %s31
      %p45 = scmp.eq.s32.totalorder %s23, 1
      %p46 = por %p44, %p45
      %p48 = scmp.ne.s32.totalorder %s31, %s47
      %p49 = scmp.eq.s32.totalorder %s23, 0
      %p50 = por %p48, %p49
      %s51 = ssub.s32 %s17, %s24
      %p52 = scmp.eq.s32.totalorder %s51, 0
      %s54 = sadd.s32 %s53, 1
      %s55 = scalar_select %p52, %s53, %s54
      %p58 = pneg %p52
      %p59 = scmp.eq.s32.totalorder %s17, 1
      %p60 = por %p58, %p59
      %p61 = scmp.ne.s32.totalorder %s53, %s56
      %p62 = scmp.eq.s32.totalorder %s17, 0
      %p63 = por %p61, %p62
      %p64 = scmp.ne.s32.totalorder %s53, %s56
      %p65 = scmp.eq.s32.totalorder %s22, 1
      %p66 = por %p64, %p65
      %p67 = scmp.ne.s32.totalorder %s56, %s57
      %p68 = scmp.eq.s32.totalorder %s22, 0
      %p69 = por %p67, %p68
      %p70 = scmp.ne.s32.totalorder %s56, %s57
      %p71 = scmp.eq.s32.totalorder %s23, 1
      %p72 = por %p70, %p71
      %p74 = scmp.ne.s32.totalorder %s57, %s73
      %p75 = scmp.eq.s32.totalorder %s23, 0
      %p76 = por %p74, %p75
      %s77 = ssub.s32 %s17, %s24
      %p78 = scmp.eq.s32.totalorder %s77, 0
      %s80 = sadd.s32 %s79, 1
      %s81 = scalar_select %p78, %s79, %s80
      %p84 = pneg %p78
      %p85 = scmp.eq.s32.totalorder %s17, 1
      %p86 = por %p84, %p85
      %p87 = scmp.ne.s32.totalorder %s79, %s82
      %p88 = scmp.eq.s32.totalorder %s17, 0
      %p89 = por %p87, %p88
      %p90 = scmp.ne.s32.totalorder %s79, %s82
      %p91 = scmp.eq.s32.totalorder %s22, 1
      %p92 = por %p90, %p91
      %p93 = scmp.ne.s32.totalorder %s82, %s83
      %p94 = scmp.eq.s32.totalorder %s22, 0
      %p95 = por %p93, %p94
      %p96 = scmp.ne.s32.totalorder %s82, %s83
      %p97 = scmp.eq.s32.totalorder %s23, 1
      %p98 = por %p96, %p97
      %p100 = scmp.ne.s32.totalorder %s83, %s99
      %p101 = scmp.eq.s32.totalorder %s23, 0
      %p102 = por %p100, %p101
      %p103 = scmp.le.s32.totalorder 1, %s17
      %p104 = scmp.lt.s32.totalorder %s17, 3
      %p105 = pnand %p103, %p104
      %p106 = pneg %p105
      // Predicated region
      $region9: #{tpu_custom_call.1} parent=5 // pred_check
        _
      $region10: #{tpu_custom_call.1} parent=5 // pred_check_branch
        %108 = sbr.rel (%p105) target = $region12
      $region11: #{tpu_custom_call.1} parent=5 // pred_region
        %s109 = ssub.s32 %s17, 1
      $region12: #{tpu_custom_call.1} parent=5 // pred_fallthru
        _
      %p110 = scmp.lt.s32.totalorder %s17, 2
      // Predicated region
      $region13: #{tpu_custom_call.1} parent=5 // pred_check
        %p111 = pneg %p110
      $region14: #{tpu_custom_call.1} parent=5 // pred_check_branch
        %113 = sbr.rel (%p111) target = $region16
      $region15: #{tpu_custom_call.1} parent=5 // pred_region
        // Predicated region
        $region17: #{tpu_custom_call.1} parent=15 // pred_check
          %p114 = pneg %p37
        $region18: #{tpu_custom_call.1} parent=15 // pred_check_branch
          %116 = sbr.rel (%p114) target = $region20
        $region19: #{tpu_custom_call.1} parent=15 // pred_region
          %s117 = sand.u32 %s27, 1
          %s118 = scalar_lea.sflag [#allocation3], %s117
          %s119 = sand.u32 %s27, 1
          %s120 = smul.addr %s119, 8
          %s121 = scalar_lea.vmem [#allocation2], %s120
          %123 = vsyncadd %s118, 0
          %s124 = smul.addr %s17, 8
          %s125 = scalar_lea.hbm %s0, %s124
          %s127 = sshll.u32 %s125, 4
          %s128 = int_to_ptr.hbm [resolvable:$true] %s127
          %s129 = sshll.u32 %s121, 4
          %s130 = int_to_ptr.vmem [resolvable:$true] %s129
          %132 = dma.hbm_to_vmem [thread:$0]  %s128, 128, %s130, %s118
        $region20: #{tpu_custom_call.1} parent=15 // pred_fallthru
          _
        // Predicated region
        $region21: #{tpu_custom_call.1} parent=15 // pred_check
          %p133 = pneg %p63
        $region22: #{tpu_custom_call.1} parent=15 // pred_check_branch
          %135 = sbr.rel (%p133) target = $region24
        $region23: #{tpu_custom_call.1} parent=15 // pred_region
          %s136 = sand.u32 %s53, 1
          %s137 = scalar_lea.sflag [#allocation6], %s136
          %s138 = sand.u32 %s53, 1
          %s139 = smul.addr %s138, 8
          %s140 = scalar_lea.vmem [#allocation5], %s139
          %142 = vsyncadd %s137, 0
          %s143 = smul.addr %s17, 8
          %s144 = scalar_lea.hbm %s1, %s143
          %s146 = sshll.u32 %s144, 4
          %s147 = int_to_ptr.hbm [resolvable:$true] %s146
          %s148 = sshll.u32 %s140, 4
          %s149 = int_to_ptr.vmem [resolvable:$true] %s148
          %151 = dma.hbm_to_vmem [thread:$0]  %s147, 128, %s149, %s137
        $region24: #{tpu_custom_call.1} parent=15 // pred_fallthru
          _
      $region16: #{tpu_custom_call.1} parent=5 // pred_fallthru
        _
      %p152 = scmp.le.s32.totalorder 1, %s17
      %p153 = scmp.lt.s32.totalorder %s17, 3
      %p154 = pnand %p152, %p153
      %p155 = pneg %p154
      // Predicated region
      $region25: #{tpu_custom_call.1} parent=5 // pred_check
        _
      $region26: #{tpu_custom_call.1} parent=5 // pred_check_branch
        %157 = sbr.rel (%p154) target = $region28
      $region27: #{tpu_custom_call.1} parent=5 // pred_region
        %s158 = ssub.s32 %s17, 1
        %s159 = sand.u32 %s30, 1
        %s160 = scalar_lea.sflag [#allocation3], %s159
        %s161 = sand.u32 %s30, 1
        %s162 = smul.addr %s161, 8
        %s163 = scalar_lea.vmem [#allocation2], %s162
        // Predicated region
        $region29: #{tpu_custom_call.1} parent=27 // pred_check
          %p164 = pneg %p43
        $region30: #{tpu_custom_call.1} parent=27 // pred_check_branch
          %166 = sbr.rel (%p164) target = $region32
        $region31: #{tpu_custom_call.1} parent=27 // pred_region
          %168 = dma.done %s160, 128
        $region32: #{tpu_custom_call.1} parent=27 // pred_fallthru
          _
        %s169 = sand.u32 %s56, 1
        %s170 = scalar_lea.sflag [#allocation6], %s169
        %s171 = sand.u32 %s56, 1
        %s172 = smul.addr %s171, 8
        %s173 = scalar_lea.vmem [#allocation5], %s172
        // Predicated region
        $region33: #{tpu_custom_call.1} parent=27 // pred_check
          %p174 = pneg %p69
        $region34: #{tpu_custom_call.1} parent=27 // pred_check_branch
          %176 = sbr.rel (%p174) target = $region36
        $region35: #{tpu_custom_call.1} parent=27 // pred_region
          %178 = dma.done %s170, 128
        $region36: #{tpu_custom_call.1} parent=27 // pred_fallthru
          _
        %s179 = sand.u32 %s30, 1
        %s180 = scalar_lea.sflag [#allocation3], %s179
        %s181 = sand.u32 %s30, 1
        %s182 = smul.addr %s181, 8
        %s183 = scalar_lea.vmem [#allocation2], %s182
        %p184 = pneg %p43
        %p185 = pneg %p40
        %s186 = sand.u32 %s56, 1
        %s187 = scalar_lea.sflag [#allocation6], %s186
        %s188 = sand.u32 %s56, 1
        %s189 = smul.addr %s188, 8
        %s190 = scalar_lea.vmem [#allocation5], %s189
        %p191 = pneg %p69
        %p192 = pneg %p66
        %p193 = pneg %p95
        %p194 = pneg %p92
        %s195 = sand.u32 %s82, 1
        %s196 = scalar_lea.sflag [#allocation4], %s195
        %s197 = sand.u32 %s82, 1
        %s198 = smul.addr %s197, 8
        %s199 = scalar_lea.vmem [#allocation7], %s198
        %v200 = vld [vmem:[%s163] sm:$0xff]
        %v201 = vld [vmem:[%s173] sm:$0xff]
        %v202 = vmul.f32 %v200, %v200
        %203 = vadd.xlane.f32.xlu0 %v202
        %v204 = vpop.xlane.xlu0 %203
        %v205 = vmul.f32 %v201, %v201
        %206 = vadd.xlane.f32.xlu0 %v205
        %v207 = vpop.xlane.xlu0 %206
        %v208 = vmul.f32 %v200, %v201
        %209 = vadd.xlane.f32.xlu0 %v208
        %v210 = vpop.xlane.xlu0 %209
        %v211 = vmax.f32 %v204, 1e-24
        %v212 = vrsqrt.pop %v211
        %v213 = vmul.f32 %v212, %v211
        %v214 = vmul.f32 %v213, %v212
        %v215 = vmul.f32 0.5, %v214
        %v216 = vsub.f32 1.5, %v215
        %v217 = vmul.f32 %v212, %v216
        %vm218 = vweird.f32 %v211
        %vm219 = vweird.f32 %v212
        %vm220 = vmor %vm218, %vm219
        %v221 = vsel %vm220, %v212, %v217
        %v222 = vmax.f32 %v207, 1e-24
        %v223 = vrsqrt.pop %v222
        %v224 = vmul.f32 %v223, %v222
        %v225 = vmul.f32 %v224, %v223
        %v226 = vmul.f32 0.5, %v225
        %v227 = vsub.f32 1.5, %v226
        %v228 = vmul.f32 %v223, %v227
        %vm229 = vweird.f32 %v222
        %vm230 = vweird.f32 %v223
        %vm231 = vmor %vm229, %vm230
        %v232 = vsel %vm231, %v223, %v228
        %v233 = vmul.f32 %v221, %v232
        %v234 = vmul.f32 %v210, %v233
        %v235 = vsub.f32 1.0, %v234
        %v236 = vmul.f32 %v235, %v235
        %v237 = vmul.f32 %v236, %v235
        %vm238 = vcmask 7168
        %v239 = vsel %vm238, %v237, 0.0
        %240 = vadd.xlane.f32.xlu0 %v239
        %v241 = vpop.xlane.xlu0 %240
        %v242 = vrot.slane %v241, 4
        %v243 = vadd.f32 %v241, %v242
        %v244 = vrot.slane %v243, 2
        %v245 = vadd.f32 %v243, %v244
        %v246 = vrot.slane %v245, 1
        %v247 = vadd.f32 %v245, %v246
        %s248 = vtos %v247
        %v249 = vstv %s248
        %250 = vst [vmem:[%s199] sm:$0xff] %v249
        %s251 = sand.u32 %s82, 1
        %s252 = scalar_lea.sflag [#allocation4], %s251
        %s253 = sand.u32 %s82, 1
        %s254 = smul.addr %s253, 8
        %s255 = scalar_lea.vmem [#allocation7], %s254
        // Predicated region
        $region37: #{tpu_custom_call.1} parent=27 // pred_check
          %p256 = pneg %p92
        $region38: #{tpu_custom_call.1} parent=27 // pred_check_branch
          %258 = sbr.rel (%p256) target = $region40
        $region39: #{tpu_custom_call.1} parent=27 // pred_region
          %260 = vsyncadd %s252, 0
          %s261 = smul.addr %s22, 8
          %s262 = scalar_lea.hbm %s2, %s261
          %s264 = sshll.u32 %s255, 4
          %s265 = int_to_ptr.vmem [resolvable:$true] %s264
          %s266 = sshll.u32 %s262, 4
          %s267 = int_to_ptr.hbm [resolvable:$true] %s266
          %269 = dma.vmem_to_hbm [thread:$0]  %s265, 128, %s267, %s252
        $region40: #{tpu_custom_call.1} parent=27 // pred_fallthru
          _
      $region28: #{tpu_custom_call.1} parent=5 // pred_fallthru
        _
      %p270 = scmp.le.s32.totalorder 2, %s17
      // Predicated region
      $region41: #{tpu_custom_call.1} parent=5 // pred_check
        %p271 = pneg %p270
      $region42: #{tpu_custom_call.1} parent=5 // pred_check_branch
        %273 = sbr.rel (%p271) target = $region44
      $region43: #{tpu_custom_call.1} parent=5 // pred_region
        %s274 = ssub.s32 %s17, 2
        // Predicated region
        $region45: #{tpu_custom_call.1} parent=43 // pred_check
          %p275 = pneg %p98
        $region46: #{tpu_custom_call.1} parent=43 // pred_check_branch
          %277 = sbr.rel (%p275) target = $region48
        $region47: #{tpu_custom_call.1} parent=43 // pred_region
          %s278 = sand.u32 %s83, 1
          %s279 = scalar_lea.sflag [#allocation4], %s278
          %s280 = sand.u32 %s83, 1
          %s281 = smul.addr %s280, 8
          %s282 = scalar_lea.vmem [#allocation7], %s281
          %284 = dma.done %s279, 128
        $region48: #{tpu_custom_call.1} parent=43 // pred_fallthru
          _
      $region44: #{tpu_custom_call.1} parent=5 // pred_fallthru
        _
    $region6: #{tpu_custom_call.1} parent=1 // loop_footer
      %s21 = sadd.s32 1, %s17
    $region7: #{tpu_custom_call.1} parent=1 // loop_footer_branch
      %16 = sbr.rel target = $region3
    $region8: #{tpu_custom_call.1} parent=1 // loop_exit
      _
    %285 = vsyncpa [#allocation3], 1
    %s286 = scalar_lea.sflag [#allocation3], 1
    %287 = vsyncpa %s286, 1
    %288 = vsyncpa [#allocation6], 1
    %s289 = scalar_lea.sflag [#allocation6], 1
    %290 = vsyncpa %s289, 1
    %291 = vsyncpa [#allocation4], 1
    %s292 = scalar_lea.sflag [#allocation4], 1
    %293 = vsyncpa %s292, 1

</llo_original>
